<compile_context>
chip_gen: v7x
topology: tpu7x:2x2x1
jax: 0.10.0
libtpu: 0.0.40
codegen_flags: <defaults>
</compile_context>

<pallas_src>
import functools
import math

import numpy as np
import jax
import jax.numpy as jnp
from jax.experimental import pallas as pl
from jax.experimental.pallas import tpu as pltpu


# ----------------------------------------------------------------------------
# In-kernel helpers
# ----------------------------------------------------------------------------
def _gate_allreduce(x, combine, num_gate, d_model):
    """All-reduce across the G gate blocks laid out along the lane axis.

    The lane axis has length G*d_model, so cyclic lane rotations by multiples
    of d_model permute the gate blocks.  For power-of-two G we use a tree
    (log2(G) rolls / combines); otherwise fall back to a linear chain.
    Rolls go to the XLU slot and are ~free next to the VALU work.
    """
    if num_gate & (num_gate - 1) == 0:          # power of two -> tree
        shift = d_model
        total = num_gate * d_model
        while shift < total:
            x = combine(x, pltpu.roll(x, shift=shift, axis=1))
            shift *= 2
        return x
    out = x
    for k in range(1, num_gate):
        out = combine(out, pltpu.roll(x, shift=k * d_model, axis=1))
    return out


# ----------------------------------------------------------------------------
# Pallas kernel
# ----------------------------------------------------------------------------
def gdc_kernel(x_ref, w_ref, o_ref, *, num_gate, d_model):
    """x_ref: [tm, G*Dk] bf16, w_ref: [G*Dk, 2*G*Dm] bf16, o_ref: [tm, G*Dm] bf16."""
    GD = num_gate * d_model

    # One wide MXU matmul producing both the value path (A) and the gate
    # path (B) side by side along the lanes; accumulate in f32.
    r = jnp.dot(x_ref[...], w_ref[...], preferred_element_type=jnp.float32)
    a = r[:, :GD]                                # [tm, G*Dm]  x_g @ W1_g per block
    b = jnp.maximum(r[:, GD:], 0.0)              # [tm, G*Dm]  relu(x_g @ W2_g)

    # Numerically-stable softmax over gates, replicated into every gate block
    # via the lane-rotation tree reduction.
    m = _gate_allreduce(b, jnp.maximum, num_gate, d_model)
    e = jnp.exp(b - m)
    ae = a * e
    denom = _gate_allreduce(e, lambda u, v: u + v, num_gate, d_model)
    num = _gate_allreduce(ae, lambda u, v: u + v, num_gate, d_model)

    # Divide on the EUP slot; result is gate-replicated [tm, G*Dm], lane-dense,
    # stored as bf16 to cut the (redundant) writeback traffic.
    o_ref[...] = (num * pl.reciprocal(denom, approx=True)).astype(o_ref.dtype)


# ----------------------------------------------------------------------------
# Wrapper
# ----------------------------------------------------------------------------
def _block_diag(w):
    """[G, Dk, Dm] -> block-diagonal [G*Dk, G*Dm]."""
    G, Dk, Dm = w.shape
    eye = jnp.eye(G, dtype=w.dtype)
    return jnp.einsum("gij,gh->gihj", w, eye).reshape(G * Dk, G * Dm)


def gated_dynamic_connection(data, w1, w2, *, tm=512,
                             mxu_dtype=jnp.bfloat16,
                             out_dtype=jnp.bfloat16):
    """data: [G, B, P, N, Dk], w1/w2: [G, Dk, Dm] -> [B, P, N, Dm] (out_dtype)."""
    G, B, P, N, Dk = data.shape
    Dm = w1.shape[-1]
    M = B * P * N
    GD_in = G * Dk
    GD_out = G * Dm

    # Cast to bf16 BEFORE the layout transpose so the wrapper-side
    # [G,M,Dk] -> [M,G*Dk] pass moves half the bytes.  (If the producer can
    # emit [B,P,N,G,Dk] directly this pass disappears entirely.)
    x = data.astype(mxu_dtype)
    x = jnp.transpose(x.reshape(G, M, Dk), (1, 0, 2)).reshape(M, GD_in)

    # Fused block-diagonal weights (built once, outside the kernel):
    #   columns [0, G*Dm)        -> W1 path (values A)
    #   columns [G*Dm, 2*G*Dm)   -> W2 path (gate logits)
    w_fused = jnp.concatenate([_block_diag(w1), _block_diag(w2)], axis=1)
    w_fused = w_fused.astype(mxu_dtype)

    # Row tile: large to amortize per-step pipeline overhead, but clamped to
    # the (8-padded) token count so tiny inputs don't pad to a full tile.
    tm = max(8, (tm // 8) * 8)
    tm = min(tm, ((M + 7) // 8) * 8)
    Mp = pl.cdiv(M, tm) * tm
    if Mp != M:
        x = jnp.pad(x, ((0, Mp - M), (0, 0)))

    out_itemsize = np.dtype(out_dtype).itemsize
    cost = pl.CostEstimate(
        flops=2 * Mp * GD_in * (2 * GD_out),
        transcendentals=2 * Mp * GD_out,              # exp + reciprocal
        bytes_accessed=(Mp * GD_in * 2                 # bf16 x
                        + GD_in * 2 * GD_out * 2       # bf16 fused weights
                        + Mp * GD_out * out_itemsize), # output
    )

    kern = functools.partial(gdc_kernel, num_gate=G, d_model=Dm)
    out = pl.pallas_call(
        kern,
        out_shape=jax.ShapeDtypeStruct((Mp, GD_out), out_dtype),
        grid_spec=pltpu.PrefetchScalarGridSpec(
            num_scalar_prefetch=0,
            grid=(Mp // tm,),
            in_specs=[
                pl.BlockSpec((tm, GD_in), lambda i: (i, 0)),
                # Constant index_map: Pallas fetches the fused weight once and
                # keeps it resident across the grid.
                pl.BlockSpec((GD_in, 2 * GD_out), lambda i: (0, 0)),
            ],
            out_specs=pl.BlockSpec((tm, GD_out), lambda i: (i, 0)),
        ),
        compiler_params=pltpu.CompilerParams(
            dimension_semantics=("parallel",),
            vmem_limit_bytes=32 * 1024 * 1024),
        cost_estimate=cost,
    )(x, w_fused)

    # The gate blocks hold identical (replicated) results; keep the first Dm
    # lanes.  Slice/reshape is cheap wrapper-side XLA (bf16 now -> half bytes).
    return out[:M, :Dm].reshape(B, P, N, Dm)


# TODO(synk): noGC=True branch (a plain nn.Linear over the concatenated gates)
# is trivial JAX glue and is not implemented here; only the default gated path
# (noGC=False) is translated to Pallas.


# ----------------------------------------------------------------------------
# Pure-JAX reference of the PyTorch forward (for verification only)
# ----------------------------------------------------------------------------
def gdc_reference(data, w1, w2):
    a = jnp.einsum("gbpnk,gkm->gbpnm", data, w1)
    b = jax.nn.relu(jnp.einsum("gbpnk,gkm->gbpnm", data, w2))
    mx = jnp.max(b, axis=0, keepdims=True)
    e = jnp.exp(b - mx)
    s = e / jnp.sum(e, axis=0, keepdims=True)
    return jnp.sum(a * s, axis=0)


# ----------------------------------------------------------------------------
if __name__ == "__main__":
    key = jax.random.PRNGKey(0)

    # Small shapes consistent with the module: [num_gate, B, P, N, d_k]
    G, B, P, N, Dk, Dm = 4, 2, 8, 16, 32, 32
    k_x, k_w1, k_w2 = jax.random.split(key, 3)

    data = jax.random.normal(k_x, (G, B, P, N, Dk), jnp.float32)

    # xavier_normal_ on (num_gate, d_k, d_model)
    fan_in = Dk * Dm
    fan_out = G * Dm
    std = math.sqrt(2.0 / (fan_in + fan_out))
    w1 = std * jax.random.normal(k_w1, (G, Dk, Dm), jnp.float32)
    w2 = std * jax.random.normal(k_w2, (G, Dk, Dm), jnp.float32)

    out = gated_dynamic_connection(data, w1, w2)
    out = jax.block_until_ready(out)
    assert out.shape == (B, P, N, Dm)

    # Verify against the pure-JAX (f32) reference; tolerance loosened for the
    # bf16 MXU inputs, bf16 output store and approximate reciprocal.
    ref = gdc_reference(data, w1, w2)
    out_f32 = np.asarray(jnp.asarray(out, jnp.float32))
    np.testing.assert_allclose(out_f32, np.asarray(ref), rtol=2e-2, atol=2e-2)

    print("KERNEL_OK")
</pallas_src>

<mosaic_0001>
module attributes {stable_mosaic.version = 11 : i64} {
  func.func @gdc_kernel(%arg0: i32, %arg1: memref<256x128xbf16, #tpu.memory_space<vmem>>, %arg2: memref<128x256xbf16, #tpu.memory_space<vmem>>, %arg3: memref<256x128xbf16, #tpu.memory_space<vmem>>) attributes {dimension_semantics = [#tpu.dimension_semantics<parallel>], iteration_bounds = array<i64: 1>, scalar_prefetch = 0 : i64, scratch_operands = 0 : i64, tpu.core_type = #tpu.core_type<tc>, window_params = [{transform_indices = @transform_0, window_bounds = array<i64: 256, 128>}, {pipeline_mode = #tpu.pipeline_mode<synchronous>, transform_indices = @transform_1, window_bounds = array<i64: 128, 256>}, {transform_indices = @transform_2, window_bounds = array<i64: 256, 128>}]} {
    %c0 = arith.constant 0 : index
    %c0_0 = arith.constant 0 : index
    %0 = vector.load %arg1[%c0, %c0_0] : memref<256x128xbf16, #tpu.memory_space<vmem>>, vector<256x128xbf16>
    %c0_1 = arith.constant 0 : index
    %c0_2 = arith.constant 0 : index
    %1 = vector.load %arg2[%c0_1, %c0_2] : memref<128x256xbf16, #tpu.memory_space<vmem>>, vector<128x256xbf16>
    %cst = arith.constant dense<0.000000e+00> : vector<256x256xf32>
    %2 = tpu.matmul %0, %1, %cst {dimension_numbers = #tpu.dot_dimension_numbers<[1], [0], [0], [1], [0, 0, 1, 1], [], []>} : vector<256x128xbf16>, vector<128x256xbf16>, vector<256x256xf32> -> vector<256x256xf32>
    %3 = vector.extract_strided_slice %2 {offsets = [0, 0], sizes = [256, 128], strides = [1, 1]} : vector<256x256xf32> to vector<256x128xf32>
    %4 = vector.extract_strided_slice %2 {offsets = [0, 128], sizes = [256, 128], strides = [1, 1]} : vector<256x256xf32> to vector<256x128xf32>
    %cst_3 = arith.constant 0.000000e+00 : f32
    %5 = vector.broadcast %cst_3 : f32 to vector<256x128xf32>
    %6 = arith.maximumf %4, %5 : vector<256x128xf32>
    %c32_i32 = arith.constant 32 : i32
    %7 = tpu.dynamic_rotate %6 by %c32_i32 dim 1 : vector<256x128xf32>, i32 -> vector<256x128xf32>
    %8 = arith.maximumf %6, %7 : vector<256x128xf32>
    %c64_i32 = arith.constant 64 : i32
    %9 = tpu.dynamic_rotate %8 by %c64_i32 dim 1 : vector<256x128xf32>, i32 -> vector<256x128xf32>
    %10 = arith.maximumf %8, %9 : vector<256x128xf32>
    %11 = arith.subf %6, %10 : vector<256x128xf32>
    %12 = math.exp %11 : vector<256x128xf32>
    %13 = arith.mulf %3, %12 : vector<256x128xf32>
    %c32_i32_4 = arith.constant 32 : i32
    %14 = tpu.dynamic_rotate %12 by %c32_i32_4 dim 1 : vector<256x128xf32>, i32 -> vector<256x128xf32>
    %15 = arith.addf %12, %14 : vector<256x128xf32>
    %c64_i32_5 = arith.constant 64 : i32
    %16 = tpu.dynamic_rotate %15 by %c64_i32_5 dim 1 : vector<256x128xf32>, i32 -> vector<256x128xf32>
    %17 = arith.addf %15, %16 : vector<256x128xf32>
    %c32_i32_6 = arith.constant 32 : i32
    %18 = tpu.dynamic_rotate %13 by %c32_i32_6 dim 1 : vector<256x128xf32>, i32 -> vector<256x128xf32>
    %19 = arith.addf %13, %18 : vector<256x128xf32>
    %c64_i32_7 = arith.constant 64 : i32
    %20 = tpu.dynamic_rotate %19 by %c64_i32_7 dim 1 : vector<256x128xf32>, i32 -> vector<256x128xf32>
    %21 = arith.addf %19, %20 : vector<256x128xf32>
    %22 = tpu.reciprocal %17 {approx = true} : vector<256x128xf32> -> vector<256x128xf32>
    %23 = arith.mulf %21, %22 : vector<256x128xf32>
    %24 = arith.truncf %23 : vector<256x128xf32> to vector<256x128xbf16>
    %c0_8 = arith.constant 0 : index
    %c0_9 = arith.constant 0 : index
    %25 = vector.load %arg3[%c0_8, %c0_9] : memref<256x128xbf16, #tpu.memory_space<vmem>>, vector<256x128xbf16>
    tpu.vector_store %arg3[%c0_8, %c0_9], %24 {strides = array<i32>} : memref<256x128xbf16, #tpu.memory_space<vmem>>, vector<256x128xbf16>,
    return
  }
  func.func @transform_0(%arg0: i32) -> (i32, i32) {
    %c0_i32 = arith.constant 0 : i32
    %c0_i32_0 = arith.constant 0 : i32
    return %arg0, %c0_i32 : i32, i32
  }
  func.func @transform_1(%arg0: i32) -> (i32, i32) {
    %c0_i32 = arith.constant 0 : i32
    %c0_i32_0 = arith.constant 0 : i32
    %c0_i32_1 = arith.constant 0 : i32
    return %c0_i32, %c0_i32_0 : i32, i32
  }
  func.func @transform_2(%arg0: i32) -> (i32, i32) {
    %c0_i32 = arith.constant 0 : i32
    %c0_i32_0 = arith.constant 0 : i32
    return %arg0, %c0_i32 : i32, i32
  }
}

</mosaic_0001>

<llo_original>
// kernel: tpu_custom_call.1
$region0: #{tpu_custom_call.1}
  #allocation0 [shape = 'u32[]', space=smem, size = 0x4, offset = 0x4, fixed_abs, tag = 'smem constant byte address 0x4 - core index']
  #allocation1 [shape = 'u32[144,128]{1,0:T(1,128)}', space=vmem, size = 0x12000, scoped, tag = 'internal scratch']
  %s0 = inlined_call_operand.hbm [shape: bf16[256,128], index: 0, kind: input, shape index: {}]
  %s1 = inlined_call_operand.hbm [shape: bf16[128,256], index: 1, kind: input, shape index: {}]
  %s2 = inlined_call_operand.hbm [shape: bf16[256,128], index: 2, kind: output, shape index: {}]
  %s3 = sld [smem:[#allocation0]]
  $region26: #{tpu_custom_call.1} parent=0
    _
  %s5 = ssub.s32 1, %s3
  %s6 = scalar_select 0, %s5, %s3
  $region1: #{tpu_custom_call.1} parent=0
    #allocation2 [shape = 'u8[65536]{0}', space=vmem, size = 0x10000, scoped, tag = 'input window, operand 0, single buffered']
    #allocation3 [shape = 's32[1]{0}', space=sflag, size = 0x4, scoped, tag = 'scoped memory for tpu_custom_call.1']
    #allocation4 [shape = 's32[1]{0}', space=sflag, size = 0x4, scoped, tag = 'scoped memory for tpu_custom_call.1']
    #allocation5 [shape = 'u8[65536]{0}', space=vmem, size = 0x10000, scoped, tag = 'input window, operand 1, single buffered']
    #allocation6 [shape = 's32[1]{0}', space=sflag, size = 0x4, scoped, tag = 'scoped memory for tpu_custom_call.1']
    #allocation7 [shape = 'u8[65536]{0}', space=vmem, size = 0x10000, scoped, tag = 'output window, operand 0, single buffered']
    %7 = vsyncpa [#allocation3], 0
    %8 = vsyncpa [#allocation6], 0
    %9 = vsyncpa [#allocation4], 0
    // Predicated region
    $region2: #{tpu_custom_call.1} parent=1 // pred_check
      _
    $region3: #{tpu_custom_call.1} parent=1 // pred_check_branch
      %11 = sbr.rel (0) target = $region5
    $region4: #{tpu_custom_call.1} parent=1 // pred_region
      %s13 = ssub.s32 2048, 2048
      %14 = vsyncadd [#allocation3], %s13
      %s15 = sshll.u32 [#allocation2], 4
      %s16 = int_to_ptr.vmem [resolvable:$true] %s15
      %21 = dma.hbm_to_vmem [thread:$0]  %s0, 2048, %s16, [#allocation3], 64, 64, 4
    $region5: #{tpu_custom_call.1} parent=1 // pred_fallthru
      _
    // Predicated region
    $region6: #{tpu_custom_call.1} parent=1 // pred_check
      _
    $region7: #{tpu_custom_call.1} parent=1 // pred_check_branch
      %23 = sbr.rel (0) target = $region9
    $region8: #{tpu_custom_call.1} parent=1 // pred_region
      %s25 = ssub.s32 2048, 2048
      %26 = vsyncadd [#allocation6], %s25
      %s27 = sshll.u32 [#allocation5], 4
      %s28 = int_to_ptr.vmem [resolvable:$true] %s27
      %33 = dma.hbm_to_vmem [thread:$0]  %s1, 2048, %s28, [#allocation6], 128, 128, 8
    $region9: #{tpu_custom_call.1} parent=1 // pred_fallthru
      _
    // Predicated region
    $region10: #{tpu_custom_call.1} parent=1 // pred_check
      _
    $region11: #{tpu_custom_call.1} parent=1 // pred_check_branch
      %35 = sbr.rel (0) target = $region13
    $region12: #{tpu_custom_call.1} parent=1 // pred_region
      %36 = dma.done [#allocation3], 2048
    $region13: #{tpu_custom_call.1} parent=1 // pred_fallthru
      _
    // Predicated region
    $region14: #{tpu_custom_call.1} parent=1 // pred_check
      _
    $region15: #{tpu_custom_call.1} parent=1 // pred_check_branch
      %38 = sbr.rel (0) target = $region17
    $region16: #{tpu_custom_call.1} parent=1 // pred_region
      %39 = dma.done [#allocation6], 2048
    $region17: #{tpu_custom_call.1} parent=1 // pred_fallthru
      _
    %v41 = vld [vmem:[#allocation2] sm:$0xf]
    %v42 = vld [vmem:[#allocation2 + $0x4] sm:$0xf]
    %v43 = vld [vmem:[#allocation2 + $0x8] sm:$0xf]
    %v44 = vld [vmem:[#allocation2 + $0xc] sm:$0xf]
    %v45 = vld [vmem:[#allocation2 + $0x10] sm:$0xf]
    %v46 = vld [vmem:[#allocation2 + $0x14] sm:$0xf]
    %v47 = vld [vmem:[#allocation2 + $0x18] sm:$0xf]
    %v48 = vld [vmem:[#allocation2 + $0x1c] sm:$0xf]
    %v49 = vld [vmem:[#allocation2 + $0x20] sm:$0xf]
    %v50 = vld [vmem:[#allocation2 + $0x24] sm:$0xf]
    %v51 = vld [vmem:[#allocation2 + $0x28] sm:$0xf]
    %v52 = vld [vmem:[#allocation2 + $0x2c] sm:$0xf]
    %v53 = vld [vmem:[#allocation2 + $0x30] sm:$0xf]
    %v54 = vld [vmem:[#allocation2 + $0x34] sm:$0xf]
    %v55 = vld [vmem:[#allocation2 + $0x38] sm:$0xf]
    %v56 = vld [vmem:[#allocation2 + $0x3c] sm:$0xf]
    %v57 = vld [vmem:[#allocation2 + $0x40] sm:$0xf]
    %v58 = vld [vmem:[#allocation2 + $0x44] sm:$0xf]
    %v59 = vld [vmem:[#allocation2 + $0x48] sm:$0xf]
    %v60 = vld [vmem:[#allocation2 + $0x4c] sm:$0xf]
    %v61 = vld [vmem:[#allocation2 + $0x50] sm:$0xf]
    %v62 = vld [vmem:[#allocation2 + $0x54] sm:$0xf]
    %v63 = vld [vmem:[#allocation2 + $0x58] sm:$0xf]
    %v64 = vld [vmem:[#allocation2 + $0x5c] sm:$0xf]
    %v65 = vld [vmem:[#allocation2 + $0x60] sm:$0xf]
    %v66 = vld [vmem:[#allocation2 + $0x64] sm:$0xf]
    %v67 = vld [vmem:[#allocation2 + $0x68] sm:$0xf]
    %v68 = vld [vmem:[#allocation2 + $0x6c] sm:$0xf]
    %v69 = vld [vmem:[#allocation2 + $0x70] sm:$0xf]
    %v70 = vld [vmem:[#allocation2 + $0x74] sm:$0xf]
    %v71 = vld [vmem:[#allocation2 + $0x78] sm:$0xf]
    %v72 = vld [vmem:[#allocation2 + $0x7c] sm:$0xf]
    %v73 = vld [vmem:[#allocation5] sm:$0xff]
    %v74 = vld [vmem:[#allocation5 + $0x8] sm:$0xff]
    %v75 = vld [vmem:[#allocation5 + $0x10] sm:$0xff]
    %v76 = vld [vmem:[#allocation5 + $0x18] sm:$0xff]
    %v77 = vld [vmem:[#allocation5 + $0x20] sm:$0xff]
    %v78 = vld [vmem:[#allocation5 + $0x28] sm:$0xff]
    %v79 = vld [vmem:[#allocation5 + $0x30] sm:$0xff]
    %v80 = vld [vmem:[#allocation5 + $0x38] sm:$0xff]
    %v81 = vld [vmem:[#allocation5 + $0x40] sm:$0xff]
    %v82 = vld [vmem:[#allocation5 + $0x48] sm:$0xff]
    %v83 = vld [vmem:[#allocation5 + $0x50] sm:$0xff]
    %v84 = vld [vmem:[#allocation5 + $0x58] sm:$0xff]
    %v85 = vld [vmem:[#allocation5 + $0x60] sm:$0xff]
    %v86 = vld [vmem:[#allocation5 + $0x68] sm:$0xff]
    %v87 = vld [vmem:[#allocation5 + $0x70] sm:$0xff]
    %v88 = vld [vmem:[#allocation5 + $0x78] sm:$0xff]
    %v121 = vunpack.c.l.b16 %v41
    %v122 = vunpack.c.l.b16 %v42
    %v123 = vunpack.c.l.b16 %v43
    %v124 = vunpack.c.l.b16 %v44
    %v125 = vunpack.c.l.b16 %v45
    %v126 = vunpack.c.l.b16 %v46
    %v127 = vunpack.c.l.b16 %v47
    %v128 = vunpack.c.l.b16 %v48
    %v129 = vunpack.c.l.b16 %v49
    %v130 = vunpack.c.l.b16 %v50
    %v131 = vunpack.c.l.b16 %v51
    %v132 = vunpack.c.l.b16 %v52
    %v133 = vunpack.c.l.b16 %v53
    %v134 = vunpack.c.l.b16 %v54
    %v135 = vunpack.c.l.b16 %v55
    %v136 = vunpack.c.l.b16 %v56
    %v137 = vunpack.c.l.b16 %v57
    %v138 = vunpack.c.l.b16 %v58
    %v139 = vunpack.c.l.b16 %v59
    %v140 = vunpack.c.l.b16 %v60
    %v141 = vunpack.c.l.b16 %v61
    %v142 = vunpack.c.l.b16 %v62
    %v143 = vunpack.c.l.b16 %v63
    %v144 = vunpack.c.l.b16 %v64
    %v145 = vunpack.c.l.b16 %v65
    %v146 = vunpack.c.l.b16 %v66
    %v147 = vunpack.c.l.b16 %v67
    %v148 = vunpack.c.l.b16 %v68
    %v149 = vunpack.c.l.b16 %v69
    %v150 = vunpack.c.l.b16 %v70
    %v151 = vunpack.c.l.b16 %v71
    %v152 = vunpack.c.l.b16 %v72
    %v153 = vpack.c.b16 %v122, %v121
    %v154 = vpack.c.b16 %v124, %v123
    %v155 = vpack.c.b16 %v126, %v125
    %v156 = vpack.c.b16 %v128, %v127
    %v157 = vpack.c.b16 %v130, %v129
    %v158 = vpack.c.b16 %v132, %v131
    %v159 = vpack.c.b16 %v134, %v133
    %v160 = vpack.c.b16 %v136, %v135
    %v161 = vpack.c.b16 %v138, %v137
    %v162 = vpack.c.b16 %v140, %v139
    %v163 = vpack.c.b16 %v142, %v141
    %v164 = vpack.c.b16 %v144, %v143
    %v165 = vpack.c.b16 %v146, %v145
    %v166 = vpack.c.b16 %v148, %v147
    %v167 = vpack.c.b16 %v150, %v149
    %v168 = vpack.c.b16 %v152, %v151
    %v201 = vunpack.c.l.b16 %v73
    %v202 = vunpack.c.h.b16 %v73
    %v203 = vunpack.c.l.b16 %v74
    %v204 = vunpack.c.h.b16 %v74
    %v205 = vunpack.c.l.b16 %v75
    %v206 = vunpack.c.h.b16 %v75
    %v207 = vunpack.c.l.b16 %v76
    %v208 = vunpack.c.h.b16 %v76
    %v209 = vunpack.c.l.b16 %v77
    %v210 = vunpack.c.h.b16 %v77
    %v211 = vunpack.c.l.b16 %v78
    %v212 = vunpack.c.h.b16 %v78
    %v213 = vunpack.c.l.b16 %v79
    %v214 = vunpack.c.h.b16 %v79
    %v215 = vunpack.c.l.b16 %v80
    %v216 = vunpack.c.h.b16 %v80
    %v217 = vunpack.c.l.b16 %v81
    %v218 = vunpack.c.h.b16 %v81
    %v219 = vunpack.c.l.b16 %v82
    %v220 = vunpack.c.h.b16 %v82
    %v221 = vunpack.c.l.b16 %v83
    %v222 = vunpack.c.h.b16 %v83
    %v223 = vunpack.c.l.b16 %v84
    %v224 = vunpack.c.h.b16 %v84
    %v225 = vunpack.c.l.b16 %v85
    %v226 = vunpack.c.h.b16 %v85
    %v227 = vunpack.c.l.b16 %v86
    %v228 = vunpack.c.h.b16 %v86
    %v229 = vunpack.c.l.b16 %v87
    %v230 = vunpack.c.h.b16 %v87
    %v231 = vunpack.c.l.b16 %v88
    %v232 = vunpack.c.h.b16 %v88
    %v233 = vpack.c.b16 %v203, %v201
    %v234 = vpack.c.b16 %v204, %v202
    %v235 = vpack.c.b16 %v207, %v205
    %v236 = vpack.c.b16 %v208, %v206
    %v237 = vpack.c.b16 %v211, %v209
    %v238 = vpack.c.b16 %v212, %v210
    %v239 = vpack.c.b16 %v215, %v213
    %v240 = vpack.c.b16 %v216, %v214
    %v241 = vpack.c.b16 %v219, %v217
    %v242 = vpack.c.b16 %v220, %v218
    %v243 = vpack.c.b16 %v223, %v221
    %v244 = vpack.c.b16 %v224, %v222
    %v245 = vpack.c.b16 %v227, %v225
    %v246 = vpack.c.b16 %v228, %v226
    %v247 = vpack.c.b16 %v231, %v229
    %v248 = vpack.c.b16 %v232, %v230
    %265 = vmatprep.subr.bf16.mxu0 %v234
    %266 = vmatpush1.bf16.msra.mxu0 %v233
    %267 = vmatprep.subr.bf16.mxu0 %v236
    %268 = vmatpush1.bf16.msra.mxu0 %v235
    %269 = vmatprep.subr.bf16.mxu0 %v238
    %270 = vmatpush1.bf16.msra.mxu0 %v237
    %271 = vmatprep.subr.bf16.mxu0 %v240
    %272 = vmatpush1.bf16.msra.mxu0 %v239
    %273 = vmatprep.subr.bf16.mxu0 %v242
    %274 = vmatpush1.bf16.msra.mxu0 %v241
    %275 = vmatprep.subr.bf16.mxu0 %v244
    %276 = vmatpush1.bf16.msra.mxu0 %v243
    %277 = vmatprep.subr.bf16.mxu0 %v246
    %278 = vmatpush1.bf16.msra.mxu0 %v245
    %279 = vmatprep.subr.bf16.mxu0 %v248
    %280 = vmatpush1.bf16.msra.mxu0 %v247
    %281 = vmatprep.subr.bf16.mxu0 0
    %282 = vmatpush1.bf16.msra.mxu0 0
    %283 = vmatprep.subr.bf16.mxu0 0
    %284 = vmatpush1.bf16.msra.mxu0 0
    %285 = vmatprep.subr.bf16.mxu0 0
    %286 = vmatpush1.bf16.msra.mxu0 0
    %287 = vmatprep.subr.bf16.mxu0 0
    %288 = vmatpush1.bf16.msra.mxu0 0
    %289 = vmatprep.subr.bf16.mxu0 0
    %290 = vmatpush1.bf16.msra.mxu0 0
    %291 = vmatprep.subr.bf16.mxu0 0
    %292 = vmatpush1.bf16.msra.mxu0 0
    %293 = vmatprep.subr.bf16.mxu0 0
    %294 = vmatpush1.bf16.msra.mxu0 0
    %295 = vmatprep.subr.bf16.mxu0 0
    %296 = vmatpush1.bf16.msra.mxu0 0
    %297 = vmatprep.mubr.bf16.mxu0 0
    %298 = vmatmul.mubr.bf16.gmra.mrb[0].mxu0 %v153
    %v299 = vpop.f32.mrb[0].mxu0
    %v300 = vadd.f32 0.0, %v299
    %v301 = vpop.f32.mrb[0].mxu0
    %v302 = vadd.f32 0.0, %v301
    %v303 = vpop.f32.mrb[0].mxu0
    %v304 = vadd.f32 0.0, %v303
    %v305 = vpop.f32.mrb[0].mxu0
    %v306 = vadd.f32 0.0, %v305
    %307 = vmatprep.mubr.bf16.mxu0 0
    %308 = vmatmul.mubr.bf16.gmra.mrb[0].mxu0 %v154
    %v309 = vpop.f32.mrb[0].mxu0
    %v310 = vadd.f32 0.0, %v309
    %v311 = vpop.f32.mrb[0].mxu0
    %v312 = vadd.f32 0.0, %v311
    %v313 = vpop.f32.mrb[0].mxu0
    %v314 = vadd.f32 0.0, %v313
    %v315 = vpop.f32.mrb[0].mxu0
    %v316 = vadd.f32 0.0, %v315
    %317 = vmatprep.mubr.bf16.mxu0 0
    %318 = vmatmul.mubr.bf16.gmra.mrb[0].mxu0 %v155
    %v319 = vpop.f32.mrb[0].mxu0
    %v320 = vadd.f32 0.0, %v319
    %v321 = vpop.f32.mrb[0].mxu0
    %v322 = vadd.f32 0.0, %v321
    %v323 = vpop.f32.mrb[0].mxu0
    %v324 = vadd.f32 0.0, %v323
    %v325 = vpop.f32.mrb[0].mxu0
    %v326 = vadd.f32 0.0, %v325
    %327 = vmatprep.mubr.bf16.mxu0 0
    %328 = vmatmul.mubr.bf16.gmra.mrb[0].mxu0 %v156
    %v329 = vpop.f32.mrb[0].mxu0
    %v330 = vadd.f32 0.0, %v329
    %v331 = vpop.f32.mrb[0].mxu0
    %v332 = vadd.f32 0.0, %v331
    %v333 = vpop.f32.mrb[0].mxu0
    %v334 = vadd.f32 0.0, %v333
    %v335 = vpop.f32.mrb[0].mxu0
    %v336 = vadd.f32 0.0, %v335
    %337 = vmatprep.mubr.bf16.mxu0 0
    %338 = vmatmul.mubr.bf16.gmra.mrb[0].mxu0 %v157
    %v339 = vpop.f32.mrb[0].mxu0
    %v340 = vadd.f32 0.0, %v339
    %v341 = vpop.f32.mrb[0].mxu0
    %v342 = vadd.f32 0.0, %v341
    %v343 = vpop.f32.mrb[0].mxu0
    %v344 = vadd.f32 0.0, %v343
    %v345 = vpop.f32.mrb[0].mxu0
    %v346 = vadd.f32 0.0, %v345
    %347 = vmatprep.mubr.bf16.mxu0 0
    %348 = vmatmul.mubr.bf16.gmra.mrb[0].mxu0 %v158
    %v349 = vpop.f32.mrb[0].mxu0
    %v350 = vadd.f32 0.0, %v349
    %v351 = vpop.f32.mrb[0].mxu0
    %v352 = vadd.f32 0.0, %v351
    %v353 = vpop.f32.mrb[0].mxu0
    %v354 = vadd.f32 0.0, %v353
    %v355 = vpop.f32.mrb[0].mxu0
    %v356 = vadd.f32 0.0, %v355
    %357 = vmatprep.mubr.bf16.mxu0 0
    %358 = vmatmul.mubr.bf16.gmra.mrb[0].mxu0 %v159
    %v359 = vpop.f32.mrb[0].mxu0
    %v360 = vadd.f32 0.0, %v359
    %v361 = vpop.f32.mrb[0].mxu0
    %v362 = vadd.f32 0.0, %v361
    %v363 = vpop.f32.mrb[0].mxu0
    %v364 = vadd.f32 0.0, %v363
    %v365 = vpop.f32.mrb[0].mxu0
    %v366 = vadd.f32 0.0, %v365
    %367 = vmatprep.mubr.bf16.mxu0 0
    %368 = vmatmul.mubr.bf16.gmra.mrb[0].mxu0 %v160
    %v369 = vpop.f32.mrb[0].mxu0
    %v370 = vadd.f32 0.0, %v369
    %v371 = vpop.f32.mrb[0].mxu0
    %v372 = vadd.f32 0.0, %v371
    %v373 = vpop.f32.mrb[0].mxu0
    %v374 = vadd.f32 0.0, %v373
    %v375 = vpop.f32.mrb[0].mxu0
    %v376 = vadd.f32 0.0, %v375
    %377 = vmatprep.mubr.bf16.mxu0 0
    %378 = vmatmul.mubr.bf16.gmra.mrb[0].mxu0 %v161
    %v379 = vpop.f32.mrb[0].mxu0
    %v380 = vadd.f32 0.0, %v379
    %v381 = vpop.f32.mrb[0].mxu0
    %v382 = vadd.f32 0.0, %v381
    %v383 = vpop.f32.mrb[0].mxu0
    %v384 = vadd.f32 0.0, %v383
    %v385 = vpop.f32.mrb[0].mxu0
    %v386 = vadd.f32 0.0, %v385
    %387 = vmatprep.mubr.bf16.mxu0 0
    %388 = vmatmul.mubr.bf16.gmra.mrb[0].mxu0 %v162
    %v389 = vpop.f32.mrb[0].mxu0
    %v390 = vadd.f32 0.0, %v389
    %v391 = vpop.f32.mrb[0].mxu0
    %v392 = vadd.f32 0.0, %v391
    %v393 = vpop.f32.mrb[0].mxu0
    %v394 = vadd.f32 0.0, %v393
    %v395 = vpop.f32.mrb[0].mxu0
    %v396 = vadd.f32 0.0, %v395
    %397 = vmatprep.mubr.bf16.mxu0 0
    %398 = vmatmul.mubr.bf16.gmra.mrb[0].mxu0 %v163
    %v399 = vpop.f32.mrb[0].mxu0
    %v400 = vadd.f32 0.0, %v399
    %v401 = vpop.f32.mrb[0].mxu0
    %v402 = vadd.f32 0.0, %v401
    %v403 = vpop.f32.mrb[0].mxu0
    %v404 = vadd.f32 0.0, %v403
    %v405 = vpop.f32.mrb[0].mxu0
    %v406 = vadd.f32 0.0, %v405
    %407 = vmatprep.mubr.bf16.mxu0 0
    %408 = vmatmul.mubr.bf16.gmra.mrb[0].mxu0 %v164
    %v409 = vpop.f32.mrb[0].mxu0
    %v410 = vadd.f32 0.0, %v409
    %v411 = vpop.f32.mrb[0].mxu0
    %v412 = vadd.f32 0.0, %v411
    %v413 = vpop.f32.mrb[0].mxu0
    %v414 = vadd.f32 0.0, %v413
    %v415 = vpop.f32.mrb[0].mxu0
    %v416 = vadd.f32 0.0, %v415
    %417 = vmatprep.mubr.bf16.mxu0 0
    %418 = vmatmul.mubr.bf16.gmra.mrb[0].mxu0 %v165
    %v419 = vpop.f32.mrb[0].mxu0
    %v420 = vadd.f32 0.0, %v419
    %v421 = vpop.f32.mrb[0].mxu0
    %v422 = vadd.f32 0.0, %v421
    %v423 = vpop.f32.mrb[0].mxu0
    %v424 = vadd.f32 0.0, %v423
    %v425 = vpop.f32.mrb[0].mxu0
    %v426 = vadd.f32 0.0, %v425
    %427 = vmatprep.mubr.bf16.mxu0 0
    %428 = vmatmul.mubr.bf16.gmra.mrb[0].mxu0 %v166
    %v429 = vpop.f32.mrb[0].mxu0
    %v430 = vadd.f32 0.0, %v429
    %v431 = vpop.f32.mrb[0].mxu0
    %v432 = vadd.f32 0.0, %v431
    %v433 = vpop.f32.mrb[0].mxu0
    %v434 = vadd.f32 0.0, %v433
    %v435 = vpop.f32.mrb[0].mxu0
    %v436 = vadd.f32 0.0, %v435
    %437 = vmatprep.mubr.bf16.mxu0 0
    %438 = vmatmul.mubr.bf16.gmra.mrb[0].mxu0 %v167
    %v439 = vpop.f32.mrb[0].mxu0
    %v440 = vadd.f32 0.0, %v439
    %v441 = vpop.f32.mrb[0].mxu0
    %v442 = vadd.f32 0.0, %v441
    %v443 = vpop.f32.mrb[0].mxu0
    %v444 = vadd.f32 0.0, %v443
    %v445 = vpop.f32.mrb[0].mxu0
    %v446 = vadd.f32 0.0, %v445
    %447 = vmatprep.mubr.bf16.mxu0 0
    %448 = vmatmul.mubr.bf16.gmra.mrb[0].mxu0 %v168
    %v449 = vpop.f32.mrb[0].mxu0
    %v450 = vadd.f32 0.0, %v449
    %v451 = vpop.f32.mrb[0].mxu0
    %v452 = vadd.f32 0.0, %v451
    %v453 = vpop.f32.mrb[0].mxu0
    %v454 = vadd.f32 0.0, %v453
    %v455 = vpop.f32.mrb[0].mxu0
    %v456 = vadd.f32 0.0, %v455
    %457 = vdwg.mxu0
    %v458 = vmax.f32 %v302, 0.0
    %v459 = vmax.f32 %v306, 0.0
    %v460 = vmax.f32 %v312, 0.0
    %v461 = vmax.f32 %v316, 0.0
    %v462 = vmax.f32 %v322, 0.0
    %v463 = vmax.f32 %v326, 0.0
    %v464 = vmax.f32 %v332, 0.0
    %v465 = vmax.f32 %v336, 0.0
    %v466 = vmax.f32 %v342, 0.0
    %v467 = vmax.f32 %v346, 0.0
    %v468 = vmax.f32 %v352, 0.0
    %v469 = vmax.f32 %v356, 0.0
    %v470 = vmax.f32 %v362, 0.0
    %v471 = vmax.f32 %v366, 0.0
    %v472 = vmax.f32 %v372, 0.0
    %v473 = vmax.f32 %v376, 0.0
    %v474 = vmax.f32 %v382, 0.0
    %v475 = vmax.f32 %v386, 0.0
    %v476 = vmax.f32 %v392, 0.0
    %v477 = vmax.f32 %v396, 0.0
    %v478 = vmax.f32 %v402, 0.0
    %v479 = vmax.f32 %v406, 0.0
    %v480 = vmax.f32 %v412, 0.0
    %v481 = vmax.f32 %v416, 0.0
    %v482 = vmax.f32 %v422, 0.0
    %v483 = vmax.f32 %v426, 0.0
    %v484 = vmax.f32 %v432, 0.0
    %v485 = vmax.f32 %v436, 0.0
    %v486 = vmax.f32 %v442, 0.0
    %v487 = vmax.f32 %v446, 0.0
    %v488 = vmax.f32 %v452, 0.0
    %v489 = vmax.f32 %v456, 0.0
    %490 = vrot.lane.b32.xlu0 %v458, 32
    %v491 = vpop.permute.xlu0 %490
    %492 = vrot.lane.b32.xlu0 %v459, 32
    %v493 = vpop.permute.xlu0 %492
    %494 = vrot.lane.b32.xlu0 %v460, 32
    %v495 = vpop.permute.xlu0 %494
    %496 = vrot.lane.b32.xlu0 %v461, 32
    %v497 = vpop.permute.xlu0 %496
    %498 = vrot.lane.b32.xlu0 %v462, 32
    %v499 = vpop.permute.xlu0 %498
    %500 = vrot.lane.b32.xlu0 %v463, 32
    %v501 = vpop.permute.xlu0 %500
    %502 = vrot.lane.b32.xlu0 %v464, 32
    %v503 = vpop.permute.xlu0 %502
    %504 = vrot.lane.b32.xlu0 %v465, 32
    %v505 = vpop.permute.xlu0 %504
    %506 = vrot.lane.b32.xlu0 %v466, 32
    %v507 = vpop.permute.xlu0 %506
    %508 = vrot.lane.b32.xlu0 %v467, 32
    %v509 = vpop.permute.xlu0 %508
    %510 = vrot.lane.b32.xlu0 %v468, 32
    %v511 = vpop.permute.xlu0 %510
    %512 = vrot.lane.b32.xlu0 %v469, 32
    %v513 = vpop.permute.xlu0 %512
    %514 = vrot.lane.b32.xlu0 %v470, 32
    %v515 = vpop.permute.xlu0 %514
    %516 = vrot.lane.b32.xlu0 %v471, 32
    %v517 = vpop.permute.xlu0 %516
    %518 = vrot.lane.b32.xlu0 %v472, 32
    %v519 = vpop.permute.xlu0 %518
    %520 = vrot.lane.b32.xlu0 %v473, 32
    %v521 = vpop.permute.xlu0 %520
    %522 = vrot.lane.b32.xlu0 %v474, 32
    %v523 = vpop.permute.xlu0 %522
    %524 = vrot.lane.b32.xlu0 %v475, 32
    %v525 = vpop.permute.xlu0 %524
    %526 = vrot.lane.b32.xlu0 %v476, 32
    %v527 = vpop.permute.xlu0 %526
    %528 = vrot.lane.b32.xlu0 %v477, 32
    %v529 = vpop.permute.xlu0 %528
    %530 = vrot.lane.b32.xlu0 %v478, 32
    %v531 = vpop.permute.xlu0 %530
    %532 = vrot.lane.b32.xlu0 %v479, 32
    %v533 = vpop.permute.xlu0 %532
    %534 = vrot.lane.b32.xlu0 %v480, 32
    %v535 = vpop.permute.xlu0 %534
    %536 = vrot.lane.b32.xlu0 %v481, 32
    %v537 = vpop.permute.xlu0 %536
    %538 = vrot.lane.b32.xlu0 %v482, 32
    %v539 = vpop.permute.xlu0 %538
    %540 = vrot.lane.b32.xlu0 %v483, 32
    %v541 = vpop.permute.xlu0 %540
    %542 = vrot.lane.b32.xlu0 %v484, 32
    %v543 = vpop.permute.xlu0 %542
    %544 = vrot.lane.b32.xlu0 %v485, 32
    %v545 = vpop.permute.xlu0 %544
    %546 = vrot.lane.b32.xlu0 %v486, 32
    %v547 = vpop.permute.xlu0 %546
    %548 = vrot.lane.b32.xlu0 %v487, 32
    %v549 = vpop.permute.xlu0 %548
    %550 = vrot.lane.b32.xlu0 %v488, 32
    %v551 = vpop.permute.xlu0 %550
    %552 = vrot.lane.b32.xlu0 %v489, 32
    %v553 = vpop.permute.xlu0 %552
    %v554 = vmax.f32 %v458, %v491
    %v555 = vmax.f32 %v459, %v493
    %v556 = vmax.f32 %v460, %v495
    %v557 = vmax.f32 %v461, %v497
    %v558 = vmax.f32 %v462, %v499
    %v559 = vmax.f32 %v463, %v501
    %v560 = vmax.f32 %v464, %v503
    %v561 = vmax.f32 %v465, %v505
    %v562 = vmax.f32 %v466, %v507
    %v563 = vmax.f32 %v467, %v509
    %v564 = vmax.f32 %v468, %v511
    %v565 = vmax.f32 %v469, %v513
    %v566 = vmax.f32 %v470, %v515
    %v567 = vmax.f32 %v471, %v517
    %v568 = vmax.f32 %v472, %v519
    %v569 = vmax.f32 %v473, %v521
    %v570 = vmax.f32 %v474, %v523
    %v571 = vmax.f32 %v475, %v525
    %v572 = vmax.f32 %v476, %v527
    %v573 = vmax.f32 %v477, %v529
    %v574 = vmax.f32 %v478, %v531
    %v575 = vmax.f32 %v479, %v533
    %v576 = vmax.f32 %v480, %v535
    %v577 = vmax.f32 %v481, %v537
    %v578 = vmax.f32 %v482, %v539
    %v579 = vmax.f32 %v483, %v541
    %v580 = vmax.f32 %v484, %v543
    %v581 = vmax.f32 %v485, %v545
    %v582 = vmax.f32 %v486, %v547
    %v583 = vmax.f32 %v487, %v549
    %v584 = vmax.f32 %v488, %v551
    %v585 = vmax.f32 %v489, %v553
    %586 = vrot.lane.b32.xlu0 %v554, 64
    %v587 = vpop.permute.xlu0 %586
    %588 = vrot.lane.b32.xlu0 %v555, 64
    %v589 = vpop.permute.xlu0 %588
    %590 = vrot.lane.b32.xlu0 %v556, 64
    %v591 = vpop.permute.xlu0 %590
    %592 = vrot.lane.b32.xlu0 %v557, 64
    %v593 = vpop.permute.xlu0 %592
    %594 = vrot.lane.b32.xlu0 %v558, 64
    %v595 = vpop.permute.xlu0 %594
    %596 = vrot.lane.b32.xlu0 %v559, 64
    %v597 = vpop.permute.xlu0 %596
    %598 = vrot.lane.b32.xlu0 %v560, 64
    %v599 = vpop.permute.xlu0 %598
    %600 = vrot.lane.b32.xlu0 %v561, 64
    %v601 = vpop.permute.xlu0 %600
    %602 = vrot.lane.b32.xlu0 %v562, 64
    %v603 = vpop.permute.xlu0 %602
    %604 = vrot.lane.b32.xlu0 %v563, 64
    %v605 = vpop.permute.xlu0 %604
    %606 = vrot.lane.b32.xlu0 %v564, 64
    %v607 = vpop.permute.xlu0 %606
    %608 = vrot.lane.b32.xlu0 %v565, 64
    %v609 = vpop.permute.xlu0 %608
    %610 = vrot.lane.b32.xlu0 %v566, 64
    %v611 = vpop.permute.xlu0 %610
    %612 = vrot.lane.b32.xlu0 %v567, 64
    %v613 = vpop.permute.xlu0 %612
    %614 = vrot.lane.b32.xlu0 %v568, 64
    %v615 = vpop.permute.xlu0 %614
    %616 = vrot.lane.b32.xlu0 %v569, 64
    %v617 = vpop.permute.xlu0 %616
    %618 = vrot.lane.b32.xlu0 %v570, 64
    %v619 = vpop.permute.xlu0 %618
    %620 = vrot.lane.b32.xlu0 %v571, 64
    %v621 = vpop.permute.xlu0 %620
    %622 = vrot.lane.b32.xlu0 %v572, 64
    %v623 = vpop.permute.xlu0 %622
    %624 = vrot.lane.b32.xlu0 %v573, 64
    %v625 = vpop.permute.xlu0 %624
    %626 = vrot.lane.b32.xlu0 %v574, 64
    %v627 = vpop.permute.xlu0 %626
    %628 = vrot.lane.b32.xlu0 %v575, 64
    %v629 = vpop.permute.xlu0 %628
    %630 = vrot.lane.b32.xlu0 %v576, 64
    %v631 = vpop.permute.xlu0 %630
    %632 = vrot.lane.b32.xlu0 %v577, 64
    %v633 = vpop.permute.xlu0 %632
    %634 = vrot.lane.b32.xlu0 %v578, 64
    %v635 = vpop.permute.xlu0 %634
    %636 = vrot.lane.b32.xlu0 %v579, 64
    %v637 = vpop.permute.xlu0 %636
    %638 = vrot.lane.b32.xlu0 %v580, 64
    %v639 = vpop.permute.xlu0 %638
    %640 = vrot.lane.b32.xlu0 %v581, 64
    %v641 = vpop.permute.xlu0 %640
    %642 = vrot.lane.b32.xlu0 %v582, 64
    %v643 = vpop.permute.xlu0 %642
    %644 = vrot.lane.b32.xlu0 %v583, 64
    %v645 = vpop.permute.xlu0 %644
    %646 = vrot.lane.b32.xlu0 %v584, 64
    %v647 = vpop.permute.xlu0 %646
    %648 = vrot.lane.b32.xlu0 %v585, 64
    %v649 = vpop.permute.xlu0 %648
    %v650 = vmax.f32 %v554, %v587
    %v651 = vmax.f32 %v555, %v589
    %v652 = vmax.f32 %v556, %v591
    %v653 = vmax.f32 %v557, %v593
    %v654 = vmax.f32 %v558, %v595
    %v655 = vmax.f32 %v559, %v597
    %v656 = vmax.f32 %v560, %v599
    %v657 = vmax.f32 %v561, %v601
    %v658 = vmax.f32 %v562, %v603
    %v659 = vmax.f32 %v563, %v605
    %v660 = vmax.f32 %v564, %v607
    %v661 = vmax.f32 %v565, %v609
    %v662 = vmax.f32 %v566, %v611
    %v663 = vmax.f32 %v567, %v613
    %v664 = vmax.f32 %v568, %v615
    %v665 = vmax.f32 %v569, %v617
    %v666 = vmax.f32 %v570, %v619
    %v667 = vmax.f32 %v571, %v621
    %v668 = vmax.f32 %v572, %v623
    %v669 = vmax.f32 %v573, %v625
    %v670 = vmax.f32 %v574, %v627
    %v671 = vmax.f32 %v575, %v629
    %v672 = vmax.f32 %v576, %v631
    %v673 = vmax.f32 %v577, %v633
    %v674 = vmax.f32 %v578, %v635
    %v675 = vmax.f32 %v579, %v637
    %v676 = vmax.f32 %v580, %v639
    %v677 = vmax.f32 %v581, %v641
    %v678 = vmax.f32 %v582, %v643
    %v679 = vmax.f32 %v583, %v645
    %v680 = vmax.f32 %v584, %v647
    %v681 = vmax.f32 %v585, %v649
    %v682 = vsub.f32 %v458, %v650
    %v683 = vsub.f32 %v459, %v651
    %v684 = vsub.f32 %v460, %v652
    %v685 = vsub.f32 %v461, %v653
    %v686 = vsub.f32 %v462, %v654
    %v687 = vsub.f32 %v463, %v655
    %v688 = vsub.f32 %v464, %v656
    %v689 = vsub.f32 %v465, %v657
    %v690 = vsub.f32 %v466, %v658
    %v691 = vsub.f32 %v467, %v659
    %v692 = vsub.f32 %v468, %v660
    %v693 = vsub.f32 %v469, %v661
    %v694 = vsub.f32 %v470, %v662
    %v695 = vsub.f32 %v471, %v663
    %v696 = vsub.f32 %v472, %v664
    %v697 = vsub.f32 %v473, %v665
    %v698 = vsub.f32 %v474, %v666
    %v699 = vsub.f32 %v475, %v667
    %v700 = vsub.f32 %v476, %v668
    %v701 = vsub.f32 %v477, %v669
    %v702 = vsub.f32 %v478, %v670
    %v703 = vsub.f32 %v479, %v671
    %v704 = vsub.f32 %v480, %v672
    %v705 = vsub.f32 %v481, %v673
    %v706 = vsub.f32 %v482, %v674
    %v707 = vsub.f32 %v483, %v675
    %v708 = vsub.f32 %v484, %v676
    %v709 = vsub.f32 %v485, %v677
    %v710 = vsub.f32 %v486, %v678
    %v711 = vsub.f32 %v487, %v679
    %v712 = vsub.f32 %v488, %v680
    %v713 = vsub.f32 %v489, %v681
    %v714 = vmul.f32 %v682, 1.442695
    %v715 = vpow.pop %v714
    %v716 = vmul.f32 %v683, 1.442695
    %v717 = vpow.pop %v716
    %v718 = vmul.f32 %v684, 1.442695
    %v719 = vpow.pop %v718
    %v720 = vmul.f32 %v685, 1.442695
    %v721 = vpow.pop %v720
    %v722 = vmul.f32 %v686, 1.442695
    %v723 = vpow.pop %v722
    %v724 = vmul.f32 %v687, 1.442695
    %v725 = vpow.pop %v724
    %v726 = vmul.f32 %v688, 1.442695
    %v727 = vpow.pop %v726
    %v728 = vmul.f32 %v689, 1.442695
    %v729 = vpow.pop %v728
    %v730 = vmul.f32 %v690, 1.442695
    %v731 = vpow.pop %v730
    %v732 = vmul.f32 %v691, 1.442695
    %v733 = vpow.pop %v732
    %v734 = vmul.f32 %v692, 1.442695
    %v735 = vpow.pop %v734
    %v736 = vmul.f32 %v693, 1.442695
    %v737 = vpow.pop %v736
    %v738 = vmul.f32 %v694, 1.442695
    %v739 = vpow.pop %v738
    %v740 = vmul.f32 %v695, 1.442695
    %v741 = vpow.pop %v740
    %v742 = vmul.f32 %v696, 1.442695
    %v743 = vpow.pop %v742
    %v744 = vmul.f32 %v697, 1.442695
    %v745 = vpow.pop %v744
    %v746 = vmul.f32 %v698, 1.442695
    %v747 = vpow.pop %v746
    %v748 = vmul.f32 %v699, 1.442695
    %v749 = vpow.pop %v748
    %v750 = vmul.f32 %v700, 1.442695
    %v751 = vpow.pop %v750
    %v752 = vmul.f32 %v701, 1.442695
    %v753 = vpow.pop %v752
    %v754 = vmul.f32 %v702, 1.442695
    %v755 = vpow.pop %v754
    %v756 = vmul.f32 %v703, 1.442695
    %v757 = vpow.pop %v756
    %v758 = vmul.f32 %v704, 1.442695
    %v759 = vpow.pop %v758
    %v760 = vmul.f32 %v705, 1.442695
    %v761 = vpow.pop %v760
    %v762 = vmul.f32 %v706, 1.442695
    %v763 = vpow.pop %v762
    %v764 = vmul.f32 %v707, 1.442695
    %v765 = vpow.pop %v764
    %v766 = vmul.f32 %v708, 1.442695
    %v767 = vpow.pop %v766
    %v768 = vmul.f32 %v709, 1.442695
    %v769 = vpow.pop %v768
    %v770 = vmul.f32 %v710, 1.442695
    %v771 = vpow.pop %v770
    %v772 = vmul.f32 %v711, 1.442695
    %v773 = vpow.pop %v772
    %v774 = vmul.f32 %v712, 1.442695
    %v775 = vpow.pop %v774
    %v776 = vmul.f32 %v713, 1.442695
    %v777 = vpow.pop %v776
    %v778 = vmul.f32 %v300, %v715
    %v779 = vmul.f32 %v304, %v717
    %v780 = vmul.f32 %v310, %v719
    %v781 = vmul.f32 %v314, %v721
    %v782 = vmul.f32 %v320, %v723
    %v783 = vmul.f32 %v324, %v725
    %v784 = vmul.f32 %v330, %v727
    %v785 = vmul.f32 %v334, %v729
    %v786 = vmul.f32 %v340, %v731
    %v787 = vmul.f32 %v344, %v733
    %v788 = vmul.f32 %v350, %v735
    %v789 = vmul.f32 %v354, %v737
    %v790 = vmul.f32 %v360, %v739
    %v791 = vmul.f32 %v364, %v741
    %v792 = vmul.f32 %v370, %v743
    %v793 = vmul.f32 %v374, %v745
    %v794 = vmul.f32 %v380, %v747
    %v795 = vmul.f32 %v384, %v749
    %v796 = vmul.f32 %v390, %v751
    %v797 = vmul.f32 %v394, %v753
    %v798 = vmul.f32 %v400, %v755
    %v799 = vmul.f32 %v404, %v757
    %v800 = vmul.f32 %v410, %v759
    %v801 = vmul.f32 %v414, %v761
    %v802 = vmul.f32 %v420, %v763
    %v803 = vmul.f32 %v424, %v765
    %v804 = vmul.f32 %v430, %v767
    %v805 = vmul.f32 %v434, %v769
    %v806 = vmul.f32 %v440, %v771
    %v807 = vmul.f32 %v444, %v773
    %v808 = vmul.f32 %v450, %v775
    %v809 = vmul.f32 %v454, %v777
    %810 = vrot.lane.b32.xlu0 %v715, 32
    %v811 = vpop.permute.xlu0 %810
    %812 = vrot.lane.b32.xlu0 %v717, 32
    %v813 = vpop.permute.xlu0 %812
    %814 = vrot.lane.b32.xlu0 %v719, 32
    %v815 = vpop.permute.xlu0 %814
    %816 = vrot.lane.b32.xlu0 %v721, 32
    %v817 = vpop.permute.xlu0 %816
    %818 = vrot.lane.b32.xlu0 %v723, 32
    %v819 = vpop.permute.xlu0 %818
    %820 = vrot.lane.b32.xlu0 %v725, 32
    %v821 = vpop.permute.xlu0 %820
    %822 = vrot.lane.b32.xlu0 %v727, 32
    %v823 = vpop.permute.xlu0 %822
    %824 = vrot.lane.b32.xlu0 %v729, 32
    %v825 = vpop.permute.xlu0 %824
    %826 = vrot.lane.b32.xlu0 %v731, 32
    %v827 = vpop.permute.xlu0 %826
    %828 = vrot.lane.b32.xlu0 %v733, 32
    %v829 = vpop.permute.xlu0 %828
    %830 = vrot.lane.b32.xlu0 %v735, 32
    %v831 = vpop.permute.xlu0 %830
    %832 = vrot.lane.b32.xlu0 %v737, 32
    %v833 = vpop.permute.xlu0 %832
    %834 = vrot.lane.b32.xlu0 %v739, 32
    %v835 = vpop.permute.xlu0 %834
    %836 = vrot.lane.b32.xlu0 %v741, 32
    %v837 = vpop.permute.xlu0 %836
    %838 = vrot.lane.b32.xlu0 %v743, 32
    %v839 = vpop.permute.xlu0 %838
    %840 = vrot.lane.b32.xlu0 %v745, 32
    %v841 = vpop.permute.xlu0 %840
    %842 = vrot.lane.b32.xlu0 %v747, 32
    %v843 = vpop.permute.xlu0 %842
    %844 = vrot.lane.b32.xlu0 %v749, 32
    %v845 = vpop.permute.xlu0 %844
    %846 = vrot.lane.b32.xlu0 %v751, 32
    %v847 = vpop.permute.xlu0 %846
    %848 = vrot.lane.b32.xlu0 %v753, 32
    %v849 = vpop.permute.xlu0 %848
    %850 = vrot.lane.b32.xlu0 %v755, 32
    %v851 = vpop.permute.xlu0 %850
    %852 = vrot.lane.b32.xlu0 %v757, 32
    %v853 = vpop.permute.xlu0 %852
    %854 = vrot.lane.b32.xlu0 %v759, 32
    %v855 = vpop.permute.xlu0 %854
    %856 = vrot.lane.b32.xlu0 %v761, 32
    %v857 = vpop.permute.xlu0 %856
    %858 = vrot.lane.b32.xlu0 %v763, 32
    %v859 = vpop.permute.xlu0 %858
    %860 = vrot.lane.b32.xlu0 %v765, 32
    %v861 = vpop.permute.xlu0 %860
    %862 = vrot.lane.b32.xlu0 %v767, 32
    %v863 = vpop.permute.xlu0 %862
    %864 = vrot.lane.b32.xlu0 %v769, 32
    %v865 = vpop.permute.xlu0 %864
    %866 = vrot.lane.b32.xlu0 %v771, 32
    %v867 = vpop.permute.xlu0 %866
    %868 = vrot.lane.b32.xlu0 %v773, 32
    %v869 = vpop.permute.xlu0 %868
    %870 = vrot.lane.b32.xlu0 %v775, 32
    %v871 = vpop.permute.xlu0 %870
    %872 = vrot.lane.b32.xlu0 %v777, 32
    %v873 = vpop.permute.xlu0 %872
    %v874 = vadd.f32 %v715, %v811
    %v875 = vadd.f32 %v717, %v813
    %v876 = vadd.f32 %v719, %v815
    %v877 = vadd.f32 %v721, %v817
    %v878 = vadd.f32 %v723, %v819
    %v879 = vadd.f32 %v725, %v821
    %v880 = vadd.f32 %v727, %v823
    %v881 = vadd.f32 %v729, %v825
    %v882 = vadd.f32 %v731, %v827
    %v883 = vadd.f32 %v733, %v829
    %v884 = vadd.f32 %v735, %v831
    %v885 = vadd.f32 %v737, %v833
    %v886 = vadd.f32 %v739, %v835
    %v887 = vadd.f32 %v741, %v837
    %v888 = vadd.f32 %v743, %v839
    %v889 = vadd.f32 %v745, %v841
    %v890 = vadd.f32 %v747, %v843
    %v891 = vadd.f32 %v749, %v845
    %v892 = vadd.f32 %v751, %v847
    %v893 = vadd.f32 %v753, %v849
    %v894 = vadd.f32 %v755, %v851
    %v895 = vadd.f32 %v757, %v853
    %v896 = vadd.f32 %v759, %v855
    %v897 = vadd.f32 %v761, %v857
    %v898 = vadd.f32 %v763, %v859
    %v899 = vadd.f32 %v765, %v861
    %v900 = vadd.f32 %v767, %v863
    %v901 = vadd.f32 %v769, %v865
    %v902 = vadd.f32 %v771, %v867
    %v903 = vadd.f32 %v773, %v869
    %v904 = vadd.f32 %v775, %v871
    %v905 = vadd.f32 %v777, %v873
    %906 = vrot.lane.b32.xlu0 %v874, 64
    %v907 = vpop.permute.xlu0 %906
    %908 = vrot.lane.b32.xlu0 %v875, 64
    %v909 = vpop.permute.xlu0 %908
    %910 = vrot.lane.b32.xlu0 %v876, 64
    %v911 = vpop.permute.xlu0 %910
    %912 = vrot.lane.b32.xlu0 %v877, 64
    %v913 = vpop.permute.xlu0 %912
    %914 = vrot.lane.b32.xlu0 %v878, 64
    %v915 = vpop.permute.xlu0 %914
    %916 = vrot.lane.b32.xlu0 %v879, 64
    %v917 = vpop.permute.xlu0 %916
    %918 = vrot.lane.b32.xlu0 %v880, 64
    %v919 = vpop.permute.xlu0 %918
    %920 = vrot.lane.b32.xlu0 %v881, 64
    %v921 = vpop.permute.xlu0 %920
    %922 = vrot.lane.b32.xlu0 %v882, 64
    %v923 = vpop.permute.xlu0 %922
    %924 = vrot.lane.b32.xlu0 %v883, 64
    %v925 = vpop.permute.xlu0 %924
    %926 = vrot.lane.b32.xlu0 %v884, 64
    %v927 = vpop.permute.xlu0 %926
    %928 = vrot.lane.b32.xlu0 %v885, 64
    %v929 = vpop.permute.xlu0 %928
    %930 = vrot.lane.b32.xlu0 %v886, 64
    %v931 = vpop.permute.xlu0 %930
    %932 = vrot.lane.b32.xlu0 %v887, 64
    %v933 = vpop.permute.xlu0 %932
    %934 = vrot.lane.b32.xlu0 %v888, 64
    %v935 = vpop.permute.xlu0 %934
    %936 = vrot.lane.b32.xlu0 %v889, 64
    %v937 = vpop.permute.xlu0 %936
    %938 = vrot.lane.b32.xlu0 %v890, 64
    %v939 = vpop.permute.xlu0 %938
    %940 = vrot.lane.b32.xlu0 %v891, 64
    %v941 = vpop.permute.xlu0 %940
    %942 = vrot.lane.b32.xlu0 %v892, 64
    %v943 = vpop.permute.xlu0 %942
    %944 = vrot.lane.b32.xlu0 %v893, 64
    %v945 = vpop.permute.xlu0 %944
    %946 = vrot.lane.b32.xlu0 %v894, 64
    %v947 = vpop.permute.xlu0 %946
    %948 = vrot.lane.b32.xlu0 %v895, 64
    %v949 = vpop.permute.xlu0 %948
    %950 = vrot.lane.b32.xlu0 %v896, 64
    %v951 = vpop.permute.xlu0 %950
    %952 = vrot.lane.b32.xlu0 %v897, 64
    %v953 = vpop.permute.xlu0 %952
    %954 = vrot.lane.b32.xlu0 %v898, 64
    %v955 = vpop.permute.xlu0 %954
    %956 = vrot.lane.b32.xlu0 %v899, 64
    %v957 = vpop.permute.xlu0 %956
    %958 = vrot.lane.b32.xlu0 %v900, 64
    %v959 = vpop.permute.xlu0 %958
    %960 = vrot.lane.b32.xlu0 %v901, 64
    %v961 = vpop.permute.xlu0 %960
    %962 = vrot.lane.b32.xlu0 %v902, 64
    %v963 = vpop.permute.xlu0 %962
    %964 = vrot.lane.b32.xlu0 %v903, 64
    %v965 = vpop.permute.xlu0 %964
    %966 = vrot.lane.b32.xlu0 %v904, 64
    %v967 = vpop.permute.xlu0 %966
    %968 = vrot.lane.b32.xlu0 %v905, 64
    %v969 = vpop.permute.xlu0 %968
    %v970 = vadd.f32 %v874, %v907
    %v971 = vadd.f32 %v875, %v909
    %v972 = vadd.f32 %v876, %v911
    %v973 = vadd.f32 %v877, %v913
    %v974 = vadd.f32 %v878, %v915
    %v975 = vadd.f32 %v879, %v917
    %v976 = vadd.f32 %v880, %v919
    %v977 = vadd.f32 %v881, %v921
    %v978 = vadd.f32 %v882, %v923
    %v979 = vadd.f32 %v883, %v925
    %v980 = vadd.f32 %v884, %v927
    %v981 = vadd.f32 %v885, %v929
    %v982 = vadd.f32 %v886, %v931
    %v983 = vadd.f32 %v887, %v933
    %v984 = vadd.f32 %v888, %v935
    %v985 = vadd.f32 %v889, %v937
    %v986 = vadd.f32 %v890, %v939
    %v987 = vadd.f32 %v891, %v941
    %v988 = vadd.f32 %v892, %v943
    %v989 = vadd.f32 %v893, %v945
    %v990 = vadd.f32 %v894, %v947
    %v991 = vadd.f32 %v895, %v949
    %v992 = vadd.f32 %v896, %v951
    %v993 = vadd.f32 %v897, %v953
    %v994 = vadd.f32 %v898, %v955
    %v995 = vadd.f32 %v899, %v957
    %v996 = vadd.f32 %v900, %v959
    %v997 = vadd.f32 %v901, %v961
    %v998 = vadd.f32 %v902, %v963
    %v999 = vadd.f32 %v903, %v965
    %v1000 = vadd.f32 %v904, %v967
    %v1001 = vadd.f32 %v905, %v969
    %1002 = vrot.lane.b32.xlu0 %v778, 32
    %v1003 = vpop.permute.xlu0 %1002
    %1004 = vrot.lane.b32.xlu0 %v779, 32
    %v1005 = vpop.permute.xlu0 %1004
    %1006 = vrot.lane.b32.xlu0 %v780, 32
    %v1007 = vpop.permute.xlu0 %1006
    %1008 = vrot.lane.b32.xlu0 %v781, 32
    %v1009 = vpop.permute.xlu0 %1008
    %1010 = vrot.lane.b32.xlu0 %v782, 32
    %v1011 = vpop.permute.xlu0 %1010
    %1012 = vrot.lane.b32.xlu0 %v783, 32
    %v1013 = vpop.permute.xlu0 %1012
    %1014 = vrot.lane.b32.xlu0 %v784, 32
    %v1015 = vpop.permute.xlu0 %1014
    %1016 = vrot.lane.b32.xlu0 %v785, 32
    %v1017 = vpop.permute.xlu0 %1016
    %1018 = vrot.lane.b32.xlu0 %v786, 32
    %v1019 = vpop.permute.xlu0 %1018
    %1020 = vrot.lane.b32.xlu0 %v787, 32
    %v1021 = vpop.permute.xlu0 %1020
    %1022 = vrot.lane.b32.xlu0 %v788, 32
    %v1023 = vpop.permute.xlu0 %1022
    %1024 = vrot.lane.b32.xlu0 %v789, 32
    %v1025 = vpop.permute.xlu0 %1024
    %1026 = vrot.lane.b32.xlu0 %v790, 32
    %v1027 = vpop.permute.xlu0 %1026
    %1028 = vrot.lane.b32.xlu0 %v791, 32
    %v1029 = vpop.permute.xlu0 %1028
    %1030 = vrot.lane.b32.xlu0 %v792, 32
    %v1031 = vpop.permute.xlu0 %1030
    %1032 = vrot.lane.b32.xlu0 %v793, 32
    %v1033 = vpop.permute.xlu0 %1032
    %1034 = vrot.lane.b32.xlu0 %v794, 32
    %v1035 = vpop.permute.xlu0 %1034
    %1036 = vrot.lane.b32.xlu0 %v795, 32
    %v1037 = vpop.permute.xlu0 %1036
    %1038 = vrot.lane.b32.xlu0 %v796, 32
    %v1039 = vpop.permute.xlu0 %1038
    %1040 = vrot.lane.b32.xlu0 %v797, 32
    %v1041 = vpop.permute.xlu0 %1040
    %1042 = vrot.lane.b32.xlu0 %v798, 32
    %v1043 = vpop.permute.xlu0 %1042
    %1044 = vrot.lane.b32.xlu0 %v799, 32
    %v1045 = vpop.permute.xlu0 %1044
    %1046 = vrot.lane.b32.xlu0 %v800, 32
    %v1047 = vpop.permute.xlu0 %1046
    %1048 = vrot.lane.b32.xlu0 %v801, 32
    %v1049 = vpop.permute.xlu0 %1048
    %1050 = vrot.lane.b32.xlu0 %v802, 32
    %v1051 = vpop.permute.xlu0 %1050
    %1052 = vrot.lane.b32.xlu0 %v803, 32
    %v1053 = vpop.permute.xlu0 %1052
    %1054 = vrot.lane.b32.xlu0 %v804, 32
    %v1055 = vpop.permute.xlu0 %1054
    %1056 = vrot.lane.b32.xlu0 %v805, 32
    %v1057 = vpop.permute.xlu0 %1056
    %1058 = vrot.lane.b32.xlu0 %v806, 32
    %v1059 = vpop.permute.xlu0 %1058
    %1060 = vrot.lane.b32.xlu0 %v807, 32
    %v1061 = vpop.permute.xlu0 %1060
    %1062 = vrot.lane.b32.xlu0 %v808, 32
    %v1063 = vpop.permute.xlu0 %1062
    %1064 = vrot.lane.b32.xlu0 %v809, 32
    %v1065 = vpop.permute.xlu0 %1064
    %v1066 = vadd.f32 %v778, %v1003
    %v1067 = vadd.f32 %v779, %v1005
    %v1068 = vadd.f32 %v780, %v1007
    %v1069 = vadd.f32 %v781, %v1009
    %v1070 = vadd.f32 %v782, %v1011
    %v1071 = vadd.f32 %v783, %v1013
    %v1072 = vadd.f32 %v784, %v1015
    %v1073 = vadd.f32 %v785, %v1017
    %v1074 = vadd.f32 %v786, %v1019
    %v1075 = vadd.f32 %v787, %v1021
    %v1076 = vadd.f32 %v788, %v1023
    %v1077 = vadd.f32 %v789, %v1025
    %v1078 = vadd.f32 %v790, %v1027
    %v1079 = vadd.f32 %v791, %v1029
    %v1080 = vadd.f32 %v792, %v1031
    %v1081 = vadd.f32 %v793, %v1033
    %v1082 = vadd.f32 %v794, %v1035
    %v1083 = vadd.f32 %v795, %v1037
    %v1084 = vadd.f32 %v796, %v1039
    %v1085 = vadd.f32 %v797, %v1041
    %v1086 = vadd.f32 %v798, %v1043
    %v1087 = vadd.f32 %v799, %v1045
    %v1088 = vadd.f32 %v800, %v1047
    %v1089 = vadd.f32 %v801, %v1049
    %v1090 = vadd.f32 %v802, %v1051
    %v1091 = vadd.f32 %v803, %v1053
    %v1092 = vadd.f32 %v804, %v1055
    %v1093 = vadd.f32 %v805, %v1057
    %v1094 = vadd.f32 %v806, %v1059
    %v1095 = vadd.f32 %v807, %v1061
    %v1096 = vadd.f32 %v808, %v1063
    %v1097 = vadd.f32 %v809, %v1065
    %1098 = vrot.lane.b32.xlu0 %v1066, 64
    %v1099 = vpop.permute.xlu0 %1098
    %1100 = vrot.lane.b32.xlu0 %v1067, 64
    %v1101 = vpop.permute.xlu0 %1100
    %1102 = vrot.lane.b32.xlu0 %v1068, 64
    %v1103 = vpop.permute.xlu0 %1102
    %1104 = vrot.lane.b32.xlu0 %v1069, 64
    %v1105 = vpop.permute.xlu0 %1104
    %1106 = vrot.lane.b32.xlu0 %v1070, 64
    %v1107 = vpop.permute.xlu0 %1106
    %1108 = vrot.lane.b32.xlu0 %v1071, 64
    %v1109 = vpop.permute.xlu0 %1108
    %1110 = vrot.lane.b32.xlu0 %v1072, 64
    %v1111 = vpop.permute.xlu0 %1110
    %1112 = vrot.lane.b32.xlu0 %v1073, 64
    %v1113 = vpop.permute.xlu0 %1112
    %1114 = vrot.lane.b32.xlu0 %v1074, 64
    %v1115 = vpop.permute.xlu0 %1114
    %1116 = vrot.lane.b32.xlu0 %v1075, 64
    %v1117 = vpop.permute.xlu0 %1116
    %1118 = vrot.lane.b32.xlu0 %v1076, 64
    %v1119 = vpop.permute.xlu0 %1118
    %1120 = vrot.lane.b32.xlu0 %v1077, 64
    %v1121 = vpop.permute.xlu0 %1120
    %1122 = vrot.lane.b32.xlu0 %v1078, 64
    %v1123 = vpop.permute.xlu0 %1122
    %1124 = vrot.lane.b32.xlu0 %v1079, 64
    %v1125 = vpop.permute.xlu0 %1124
    %1126 = vrot.lane.b32.xlu0 %v1080, 64
    %v1127 = vpop.permute.xlu0 %1126
    %1128 = vrot.lane.b32.xlu0 %v1081, 64
    %v1129 = vpop.permute.xlu0 %1128
    %1130 = vrot.lane.b32.xlu0 %v1082, 64
    %v1131 = vpop.permute.xlu0 %1130
    %1132 = vrot.lane.b32.xlu0 %v1083, 64
    %v1133 = vpop.permute.xlu0 %1132
    %1134 = vrot.lane.b32.xlu0 %v1084, 64
    %v1135 = vpop.permute.xlu0 %1134
    %1136 = vrot.lane.b32.xlu0 %v1085, 64
    %v1137 = vpop.permute.xlu0 %1136
    %1138 = vrot.lane.b32.xlu0 %v1086, 64
    %v1139 = vpop.permute.xlu0 %1138
    %1140 = vrot.lane.b32.xlu0 %v1087, 64
    %v1141 = vpop.permute.xlu0 %1140
    %1142 = vrot.lane.b32.xlu0 %v1088, 64
    %v1143 = vpop.permute.xlu0 %1142
    %1144 = vrot.lane.b32.xlu0 %v1089, 64
    %v1145 = vpop.permute.xlu0 %1144
    %1146 = vrot.lane.b32.xlu0 %v1090, 64
    %v1147 = vpop.permute.xlu0 %1146
    %1148 = vrot.lane.b32.xlu0 %v1091, 64
    %v1149 = vpop.permute.xlu0 %1148
    %1150 = vrot.lane.b32.xlu0 %v1092, 64
    %v1151 = vpop.permute.xlu0 %1150
    %1152 = vrot.lane.b32.xlu0 %v1093, 64
    %v1153 = vpop.permute.xlu0 %1152
    %1154 = vrot.lane.b32.xlu0 %v1094, 64
    %v1155 = vpop.permute.xlu0 %1154
    %1156 = vrot.lane.b32.xlu0 %v1095, 64
    %v1157 = vpop.permute.xlu0 %1156
    %1158 = vrot.lane.b32.xlu0 %v1096, 64
    %v1159 = vpop.permute.xlu0 %1158
    %1160 = vrot.lane.b32.xlu0 %v1097, 64
    %v1161 = vpop.permute.xlu0 %1160
    %v1162 = vadd.f32 %v1066, %v1099
    %v1163 = vadd.f32 %v1067, %v1101
    %v1164 = vadd.f32 %v1068, %v1103
    %v1165 = vadd.f32 %v1069, %v1105
    %v1166 = vadd.f32 %v1070, %v1107
    %v1167 = vadd.f32 %v1071, %v1109
    %v1168 = vadd.f32 %v1072, %v1111
    %v1169 = vadd.f32 %v1073, %v1113
    %v1170 = vadd.f32 %v1074, %v1115
    %v1171 = vadd.f32 %v1075, %v1117
    %v1172 = vadd.f32 %v1076, %v1119
    %v1173 = vadd.f32 %v1077, %v1121
    %v1174 = vadd.f32 %v1078, %v1123
    %v1175 = vadd.f32 %v1079, %v1125
    %v1176 = vadd.f32 %v1080, %v1127
    %v1177 = vadd.f32 %v1081, %v1129
    %v1178 = vadd.f32 %v1082, %v1131
    %v1179 = vadd.f32 %v1083, %v1133
    %v1180 = vadd.f32 %v1084, %v1135
    %v1181 = vadd.f32 %v1085, %v1137
    %v1182 = vadd.f32 %v1086, %v1139
    %v1183 = vadd.f32 %v1087, %v1141
    %v1184 = vadd.f32 %v1088, %v1143
    %v1185 = vadd.f32 %v1089, %v1145
    %v1186 = vadd.f32 %v1090, %v1147
    %v1187 = vadd.f32 %v1091, %v1149
    %v1188 = vadd.f32 %v1092, %v1151
    %v1189 = vadd.f32 %v1093, %v1153
    %v1190 = vadd.f32 %v1094, %v1155
    %v1191 = vadd.f32 %v1095, %v1157
    %v1192 = vadd.f32 %v1096, %v1159
    %v1193 = vadd.f32 %v1097, %v1161
    %v1194 = vrcp.pop %v970
    %v1195 = vrcp.pop %v971
    %v1196 = vrcp.pop %v972
    %v1197 = vrcp.pop %v973
    %v1198 = vrcp.pop %v974
    %v1199 = vrcp.pop %v975
    %v1200 = vrcp.pop %v976
    %v1201 = vrcp.pop %v977
    %v1202 = vrcp.pop %v978
    %v1203 = vrcp.pop %v979
    %v1204 = vrcp.pop %v980
    %v1205 = vrcp.pop %v981
    %v1206 = vrcp.pop %v982
    %v1207 = vrcp.pop %v983
    %v1208 = vrcp.pop %v984
    %v1209 = vrcp.pop %v985
    %v1210 = vrcp.pop %v986
    %v1211 = vrcp.pop %v987
    %v1212 = vrcp.pop %v988
    %v1213 = vrcp.pop %v989
    %v1214 = vrcp.pop %v990
    %v1215 = vrcp.pop %v991
    %v1216 = vrcp.pop %v992
    %v1217 = vrcp.pop %v993
    %v1218 = vrcp.pop %v994
    %v1219 = vrcp.pop %v995
    %v1220 = vrcp.pop %v996
    %v1221 = vrcp.pop %v997
    %v1222 = vrcp.pop %v998
    %v1223 = vrcp.pop %v999
    %v1224 = vrcp.pop %v1000
    %v1225 = vrcp.pop %v1001
    %v1226 = vmul.f32 %v1162, %v1194
    %v1227 = vmul.f32 %v1163, %v1195
    %v1228 = vmul.f32 %v1164, %v1196
    %v1229 = vmul.f32 %v1165, %v1197
    %v1230 = vmul.f32 %v1166, %v1198
    %v1231 = vmul.f32 %v1167, %v1199
    %v1232 = vmul.f32 %v1168, %v1200
    %v1233 = vmul.f32 %v1169, %v1201
    %v1234 = vmul.f32 %v1170, %v1202
    %v1235 = vmul.f32 %v1171, %v1203
    %v1236 = vmul.f32 %v1172, %v1204
    %v1237 = vmul.f32 %v1173, %v1205
    %v1238 = vmul.f32 %v1174, %v1206
    %v1239 = vmul.f32 %v1175, %v1207
    %v1240 = vmul.f32 %v1176, %v1208
    %v1241 = vmul.f32 %v1177, %v1209
    %v1242 = vmul.f32 %v1178, %v1210
    %v1243 = vmul.f32 %v1179, %v1211
    %v1244 = vmul.f32 %v1180, %v1212
    %v1245 = vmul.f32 %v1181, %v1213
    %v1246 = vmul.f32 %v1182, %v1214
    %v1247 = vmul.f32 %v1183, %v1215
    %v1248 = vmul.f32 %v1184, %v1216
    %v1249 = vmul.f32 %v1185, %v1217
    %v1250 = vmul.f32 %v1186, %v1218
    %v1251 = vmul.f32 %v1187, %v1219
    %v1252 = vmul.f32 %v1188, %v1220
    %v1253 = vmul.f32 %v1189, %v1221
    %v1254 = vmul.f32 %v1190, %v1222
    %v1255 = vmul.f32 %v1191, %v1223
    %v1256 = vmul.f32 %v1192, %v1224
    %v1257 = vmul.f32 %v1193, %v1225
    %v1258 = vpack.c.bf16 %v1227, %v1226
    %v1259 = vpack.c.bf16 %v1229, %v1228
    %v1260 = vpack.c.bf16 %v1231, %v1230
    %v1261 = vpack.c.bf16 %v1233, %v1232
    %v1262 = vpack.c.bf16 %v1235, %v1234
    %v1263 = vpack.c.bf16 %v1237, %v1236
    %v1264 = vpack.c.bf16 %v1239, %v1238
    %v1265 = vpack.c.bf16 %v1241, %v1240
    %v1266 = vpack.c.bf16 %v1243, %v1242
    %v1267 = vpack.c.bf16 %v1245, %v1244
    %v1268 = vpack.c.bf16 %v1247, %v1246
    %v1269 = vpack.c.bf16 %v1249, %v1248
    %v1270 = vpack.c.bf16 %v1251, %v1250
    %v1271 = vpack.c.bf16 %v1253, %v1252
    %v1272 = vpack.c.bf16 %v1255, %v1254
    %v1273 = vpack.c.bf16 %v1257, %v1256
    %v1290 = vunpack.c.l.b16 %v1258
    %v1291 = vunpack.c.h.b16 %v1258
    %v1292 = vunpack.c.l.b16 %v1259
    %v1293 = vunpack.c.h.b16 %v1259
    %v1294 = vunpack.c.l.b16 %v1260
    %v1295 = vunpack.c.h.b16 %v1260
    %v1296 = vunpack.c.l.b16 %v1261
    %v1297 = vunpack.c.h.b16 %v1261
    %v1298 = vunpack.c.l.b16 %v1262
    %v1299 = vunpack.c.h.b16 %v1262
    %v1300 = vunpack.c.l.b16 %v1263
    %v1301 = vunpack.c.h.b16 %v1263
    %v1302 = vunpack.c.l.b16 %v1264
    %v1303 = vunpack.c.h.b16 %v1264
    %v1304 = vunpack.c.l.b16 %v1265
    %v1305 = vunpack.c.h.b16 %v1265
    %v1306 = vunpack.c.l.b16 %v1266
    %v1307 = vunpack.c.h.b16 %v1266
    %v1308 = vunpack.c.l.b16 %v1267
    %v1309 = vunpack.c.h.b16 %v1267
    %v1310 = vunpack.c.l.b16 %v1268
    %v1311 = vunpack.c.h.b16 %v1268
    %v1312 = vunpack.c.l.b16 %v1269
    %v1313 = vunpack.c.h.b16 %v1269
    %v1314 = vunpack.c.l.b16 %v1270
    %v1315 = vunpack.c.h.b16 %v1270
    %v1316 = vunpack.c.l.b16 %v1271
    %v1317 = vunpack.c.h.b16 %v1271
    %v1318 = vunpack.c.l.b16 %v1272
    %v1319 = vunpack.c.h.b16 %v1272
    %v1320 = vunpack.c.l.b16 %v1273
    %v1321 = vunpack.c.h.b16 %v1273
    %v1322 = vpack.c.b16 %v1290, %v1290
    %v1323 = vpack.c.b16 %v1291, %v1291
    %v1324 = vpack.c.b16 %v1292, %v1292
    %v1325 = vpack.c.b16 %v1293, %v1293
    %v1326 = vpack.c.b16 %v1294, %v1294
    %v1327 = vpack.c.b16 %v1295, %v1295
    %v1328 = vpack.c.b16 %v1296, %v1296
    %v1329 = vpack.c.b16 %v1297, %v1297
    %v1330 = vpack.c.b16 %v1298, %v1298
    %v1331 = vpack.c.b16 %v1299, %v1299
    %v1332 = vpack.c.b16 %v1300, %v1300
    %v1333 = vpack.c.b16 %v1301, %v1301
    %v1334 = vpack.c.b16 %v1302, %v1302
    %v1335 = vpack.c.b16 %v1303, %v1303
    %v1336 = vpack.c.b16 %v1304, %v1304
    %v1337 = vpack.c.b16 %v1305, %v1305
    %v1338 = vpack.c.b16 %v1306, %v1306
    %v1339 = vpack.c.b16 %v1307, %v1307
    %v1340 = vpack.c.b16 %v1308, %v1308
    %v1341 = vpack.c.b16 %v1309, %v1309
    %v1342 = vpack.c.b16 %v1310, %v1310
    %v1343 = vpack.c.b16 %v1311, %v1311
    %v1344 = vpack.c.b16 %v1312, %v1312
    %v1345 = vpack.c.b16 %v1313, %v1313
    %v1346 = vpack.c.b16 %v1314, %v1314
    %v1347 = vpack.c.b16 %v1315, %v1315
    %v1348 = vpack.c.b16 %v1316, %v1316
    %v1349 = vpack.c.b16 %v1317, %v1317
    %v1350 = vpack.c.b16 %v1318, %v1318
    %v1351 = vpack.c.b16 %v1319, %v1319
    %v1352 = vpack.c.b16 %v1320, %v1320
    %v1353 = vpack.c.b16 %v1321, %v1321
    %1386 = vst [vmem:[#allocation7] sm:$0xf] %v1322
    %1387 = vst [vmem:[#allocation7 + $0x4] sm:$0xf] %v1323
    %1388 = vst [vmem:[#allocation7 + $0x8] sm:$0xf] %v1324
    %1389 = vst [vmem:[#allocation7 + $0xc] sm:$0xf] %v1325
    %1390 = vst [vmem:[#allocation7 + $0x10] sm:$0xf] %v1326
    %1391 = vst [vmem:[#allocation7 + $0x14] sm:$0xf] %v1327
    %1392 = vst [vmem:[#allocation7 + $0x18] sm:$0xf] %v1328
    %1393 = vst [vmem:[#allocation7 + $0x1c] sm:$0xf] %v1329
    %1394 = vst [vmem:[#allocation7 + $0x20] sm:$0xf] %v1330
    %1395 = vst [vmem:[#allocation7 + $0x24] sm:$0xf] %v1331
    %1396 = vst [vmem:[#allocation7 + $0x28] sm:$0xf] %v1332
    %1397 = vst [vmem:[#allocation7 + $0x2c] sm:$0xf] %v1333
    %1398 = vst [vmem:[#allocation7 + $0x30] sm:$0xf] %v1334
    %1399 = vst [vmem:[#allocation7 + $0x34] sm:$0xf] %v1335
    %1400 = vst [vmem:[#allocation7 + $0x38] sm:$0xf] %v1336
    %1401 = vst [vmem:[#allocation7 + $0x3c] sm:$0xf] %v1337
    %1402 = vst [vmem:[#allocation7 + $0x40] sm:$0xf] %v1338
    %1403 = vst [vmem:[#allocation7 + $0x44] sm:$0xf] %v1339
    %1404 = vst [vmem:[#allocation7 + $0x48] sm:$0xf] %v1340
    %1405 = vst [vmem:[#allocation7 + $0x4c] sm:$0xf] %v1341
    %1406 = vst [vmem:[#allocation7 + $0x50] sm:$0xf] %v1342
    %1407 = vst [vmem:[#allocation7 + $0x54] sm:$0xf] %v1343
    %1408 = vst [vmem:[#allocation7 + $0x58] sm:$0xf] %v1344
    %1409 = vst [vmem:[#allocation7 + $0x5c] sm:$0xf] %v1345
    %1410 = vst [vmem:[#allocation7 + $0x60] sm:$0xf] %v1346
    %1411 = vst [vmem:[#allocation7 + $0x64] sm:$0xf] %v1347
    %1412 = vst [vmem:[#allocation7 + $0x68] sm:$0xf] %v1348
    %1413 = vst [vmem:[#allocation7 + $0x6c] sm:$0xf] %v1349
    %1414 = vst [vmem:[#allocation7 + $0x70] sm:$0xf] %v1350
    %1415 = vst [vmem:[#allocation7 + $0x74] sm:$0xf] %v1351
    %1416 = vst [vmem:[#allocation7 + $0x78] sm:$0xf] %v1352
    %1417 = vst [vmem:[#allocation7 + $0x7c] sm:$0xf] %v1353
    // Predicated region
    $region18: #{tpu_custom_call.1} parent=1 // pred_check
      _
    $region19: #{tpu_custom_call.1} parent=1 // pred_check_branch
      %1419 = sbr.rel (0) target = $region21
    $region20: #{tpu_custom_call.1} parent=1 // pred_region
      %s1421 = ssub.s32 2048, 2048
      %1422 = vsyncadd [#allocation4], %s1421
      %s1423 = sshll.u32 [#allocation7], 4
      %s1424 = int_to_ptr.vmem [resolvable:$true] %s1423
      %1429 = dma.vmem_to_hbm [thread:$0]  %s1424, 2048, %s2, [#allocation4], 64, 64, 4
    $region21: #{tpu_custom_call.1} parent=1 // pred_fallthru
      _
    // Predicated region
    $region22: #{tpu_custom_call.1} parent=1 // pred_check
      _
    $region23: #{tpu_custom_call.1} parent=1 // pred_check_branch
      %1431 = sbr.rel (0) target = $region25
    $region24: #{tpu_custom_call.1} parent=1 // pred_region
      %1432 = dma.done [#allocation4], 2048
    $region25: #{tpu_custom_call.1} parent=1 // pred_fallthru
      _
    %1433 = vsyncpa [#allocation3], 1
    %1434 = vsyncpa [#allocation6], 1
    %1435 = vsyncpa [#allocation4], 1

</llo_original>
